<compile_context>
chip_gen: v7x
topology: tpu7x:2x2x1
jax: 0.10.0
libtpu: 0.0.40
codegen_flags: <defaults>
</compile_context>

<pallas_src>
import jax
import jax.numpy as jnp
from jax.experimental import pallas as pl
from jax.experimental.pallas import tpu as pltpu


def _copy_kernel(x_ref, o_ref):
    # Identity copy of the current lane-dense tile: unmasked full-width
    # vld/vst, contiguous DMA on both sides.
    o_ref[...] = x_ref[...]


def _per_buffer_budget():
    """(per-buffer tile byte budget, vmem_limit_bytes), generation-aware."""
    tile_bytes = 8 * 1024 * 1024          # v5e / v6e: 128 MiB physical VMEM
    vmem_limit = 64 * 1024 * 1024
    try:
        info = pltpu.get_tpu_info()
        cap = getattr(info, "vmem_capacity_bytes", None)
        if cap is not None and cap <= 64 * 1024 * 1024:   # v7x-class part
            tile_bytes = 4 * 1024 * 1024
            vmem_limit = 32 * 1024 * 1024
    except Exception:
        pass
    return tile_bytes, vmem_limit


def _largest_divisor_leq(n, cap):
    """Largest divisor of n that is <= cap (always >= 1)."""
    cap = max(1, cap)
    best = 1
    d = 1
    while d * d <= n:
        if n % d == 0:
            q = n // d
            if d <= cap and d > best:
                best = d
            if q <= cap and q > best:
                best = q
        d += 1
    return best


def unflatten(x, shape, start_dim=1):
    """Pallas equivalent of Unflatten(start_dim=1, shape).

    x: (B, F) (or (B, ...) flattening to F) with F == prod(shape).
    Returns (B, *shape) with identical data (PyTorch .view semantics).
    """
    assert start_dim == 1, "only start_dim == 1 is supported (as in the module)"
    shape = tuple(int(s) for s in shape)
    B = int(x.shape[0])
    F = 1
    for s in x.shape[1:]:
        F *= int(s)
    prod = 1
    for s in shape:
        prod *= s
    assert prod == F, f"prod(shape)={prod} must equal flattened trailing dims {F}"

    out_shape = (B,) + shape
    total = B * F
    itemsize = jnp.dtype(x.dtype).itemsize
    # Sublane multiple depends on dtype packing (f32:8, bf16:16, int8/fp8:32).
    sub = {4: 8, 2: 16, 1: 32}.get(itemsize, 8)
    unit = sub * 128                       # elements per dtype-native (sub,128) tile

    tile_bytes, vmem_limit = _per_buffer_budget()
    compiler_params = pltpu.CompilerParams(
        dimension_semantics=("parallel",),
        vmem_limit_bytes=vmem_limit,
    )
    cost = pl.CostEstimate(
        flops=0, transcendentals=0, bytes_accessed=2 * total * itemsize
    )

    flat = x.reshape((total,))             # metadata-only

    if total % unit == 0:
        # Fully aligned hot path: present the slab as a (rows, 128) lane-dense
        # contiguous view and tile it in multiples of the native (sub,128) tile.
        n_units = total // unit
        units_cap = max(1, tile_bytes // (unit * itemsize))
        ub = _largest_divisor_leq(n_units, units_cap)
        grid_n = n_units // ub
        # v7x megacore: prefer an even tile count when it costs <= 2x tile size.
        if grid_n > 1 and grid_n % 2 == 1 and n_units % 2 == 0:
            ub_even = _largest_divisor_leq(n_units // 2, units_cap)
            if 2 * ub_even >= ub:
                ub = ub_even
                grid_n = n_units // ub

        rows = total // 128                # multiple of sub (since total % unit == 0)
        tb = ub * sub                      # block rows: multiple of sub, divides rows
        x2d = flat.reshape((rows, 128))

        y2d = pl.pallas_call(
            _copy_kernel,
            out_shape=jax.ShapeDtypeStruct((rows, 128), x.dtype),
            grid=(grid_n,),
            in_specs=[pl.BlockSpec((tb, 128), lambda i: (i, 0))],
            out_specs=pl.BlockSpec((tb, 128), lambda i: (i, 0)),
            compiler_params=compiler_params,
            cost_estimate=cost,
        )(x2d)
        return y2d.reshape(out_shape)

    if total * itemsize <= tile_bytes:
        # Small, unaligned slab: a single full-extent block (always legal).
        x2d = flat.reshape((1, total))
        y2d = pl.pallas_call(
            _copy_kernel,
            out_shape=jax.ShapeDtypeStruct((1, total), x.dtype),
            grid=(1,),
            in_specs=[pl.BlockSpec((1, total), lambda i: (0, 0))],
            out_specs=pl.BlockSpec((1, total), lambda i: (0, 0)),
            compiler_params=compiler_params,
            cost_estimate=cost,
        )(x2d)
        return y2d.reshape(out_shape)

    # TODO(synk): huge slabs whose element count is not (sub*128)-divisible
    # would need padded/masked tiling; Unflatten is a pure view, so the
    # metadata-only reshape below is the exact (and fastest) semantics.
    return flat.reshape(out_shape)


if __name__ == "__main__":
    key = jax.random.PRNGKey(0)
    B = 2
    target_shape = (4, 16, 16)             # shape passed to Unflatten
    F = 4 * 16 * 16                        # 1024

    x = jax.random.normal(key, (B, F), dtype=jnp.float32)

    # Reference (torch .view semantics).
    expected = jnp.reshape(x, (B,) + target_shape)

    y = unflatten(x, target_shape, start_dim=1)
    y = jax.block_until_ready(y)

    assert y.shape == (B,) + target_shape, y.shape
    assert y.dtype == expected.dtype
    assert bool(jnp.array_equal(y, expected))

    print("KERNEL_OK")
</pallas_src>

<mosaic_0001>
module attributes {stable_mosaic.version = 11 : i64} {
  func.func @_copy_kernel(%arg0: i32, %arg1: memref<16x128xf32, #tpu.memory_space<vmem>>, %arg2: memref<16x128xf32, #tpu.memory_space<vmem>>) attributes {dimension_semantics = [#tpu.dimension_semantics<parallel>], iteration_bounds = array<i64: 1>, scalar_prefetch = 0 : i64, scratch_operands = 0 : i64, tpu.core_type = #tpu.core_type<tc>, window_params = [{transform_indices = @transform_0, window_bounds = array<i64: 16, 128>}, {transform_indices = @transform_1, window_bounds = array<i64: 16, 128>}]} {
    %c0 = arith.constant 0 : index
    %c0_0 = arith.constant 0 : index
    %0 = vector.load %arg1[%c0, %c0_0] : memref<16x128xf32, #tpu.memory_space<vmem>>, vector<16x128xf32>
    %c0_1 = arith.constant 0 : index
    %c0_2 = arith.constant 0 : index
    %1 = vector.load %arg2[%c0_1, %c0_2] : memref<16x128xf32, #tpu.memory_space<vmem>>, vector<16x128xf32>
    tpu.vector_store %arg2[%c0_1, %c0_2], %0 {strides = array<i32>} : memref<16x128xf32, #tpu.memory_space<vmem>>, vector<16x128xf32>,
    return
  }
  func.func @transform_0(%arg0: i32) -> (i32, i32) {
    %c0_i32 = arith.constant 0 : i32
    %c0_i32_0 = arith.constant 0 : i32
    return %arg0, %c0_i32 : i32, i32
  }
  func.func @transform_1(%arg0: i32) -> (i32, i32) {
    %c0_i32 = arith.constant 0 : i32
    %c0_i32_0 = arith.constant 0 : i32
    return %arg0, %c0_i32 : i32, i32
  }
}

</mosaic_0001>

<llo_original>
// kernel: tpu_custom_call.1
$region0: #{tpu_custom_call.1}
  #allocation0 [shape = 'u32[]', space=smem, size = 0x4, offset = 0x4, fixed_abs, tag = 'smem constant byte address 0x4 - core index']
  #allocation1 [shape = 'u32[144,128]{1,0:T(1,128)}', space=vmem, size = 0x12000, scoped, tag = 'internal scratch']
  %s0 = inlined_call_operand.hbm [shape: f32[16,128], index: 0, kind: input, shape index: {}]
  %s1 = inlined_call_operand.hbm [shape: f32[16,128], index: 1, kind: output, shape index: {}]
  %s2 = sld [smem:[#allocation0]]
  $region18: #{tpu_custom_call.1} parent=0
    _
  %s4 = ssub.s32 1, %s2
  %s5 = scalar_select 0, %s4, %s2
  $region1: #{tpu_custom_call.1} parent=0
    #allocation2 [shape = 'u8[8192]{0}', space=vmem, size = 0x2000, scoped, tag = 'input window, operand 0, single buffered']
    #allocation3 [shape = 's32[1]{0}', space=sflag, size = 0x4, scoped, tag = 'scoped memory for tpu_custom_call.1']
    #allocation4 [shape = 's32[1]{0}', space=sflag, size = 0x4, scoped, tag = 'scoped memory for tpu_custom_call.1']
    #allocation5 [shape = 'u8[8192]{0}', space=vmem, size = 0x2000, scoped, tag = 'output window, operand 0, single buffered']
    %6 = vsyncpa [#allocation3], 0
    %7 = vsyncpa [#allocation4], 0
    // Predicated region
    $region2: #{tpu_custom_call.1} parent=1 // pred_check
      _
    $region3: #{tpu_custom_call.1} parent=1 // pred_check_branch
      %9 = sbr.rel (0) target = $region5
    $region4: #{tpu_custom_call.1} parent=1 // pred_region
      %s11 = ssub.s32 256, 256
      %12 = vsyncadd [#allocation3], %s11
      %s13 = sshll.u32 [#allocation2], 4
      %s14 = int_to_ptr.vmem [resolvable:$true] %s13
      %19 = dma.hbm_to_vmem [thread:$0]  %s0, 256, %s14, [#allocation3], 128, 128, 8
    $region5: #{tpu_custom_call.1} parent=1 // pred_fallthru
      _
    // Predicated region
    $region6: #{tpu_custom_call.1} parent=1 // pred_check
      _
    $region7: #{tpu_custom_call.1} parent=1 // pred_check_branch
      %21 = sbr.rel (0) target = $region9
    $region8: #{tpu_custom_call.1} parent=1 // pred_region
      %22 = dma.done [#allocation3], 256
    $region9: #{tpu_custom_call.1} parent=1 // pred_fallthru
      _
    %v23 = vld [vmem:[#allocation2] sm:$0xff]
    %v24 = vld [vmem:[#allocation2 + $0x8] sm:$0xff]
    %25 = vst [vmem:[#allocation5] sm:$0xff] %v23
    %26 = vst [vmem:[#allocation5 + $0x8] sm:$0xff] %v24
    // Predicated region
    $region10: #{tpu_custom_call.1} parent=1 // pred_check
      _
    $region11: #{tpu_custom_call.1} parent=1 // pred_check_branch
      %28 = sbr.rel (0) target = $region13
    $region12: #{tpu_custom_call.1} parent=1 // pred_region
      %s30 = ssub.s32 256, 256
      %31 = vsyncadd [#allocation4], %s30
      %s32 = sshll.u32 [#allocation5], 4
      %s33 = int_to_ptr.vmem [resolvable:$true] %s32
      %38 = dma.vmem_to_hbm [thread:$0]  %s33, 256, %s1, [#allocation4], 128, 128, 8
    $region13: #{tpu_custom_call.1} parent=1 // pred_fallthru
      _
    // Predicated region
    $region14: #{tpu_custom_call.1} parent=1 // pred_check
      _
    $region15: #{tpu_custom_call.1} parent=1 // pred_check_branch
      %40 = sbr.rel (0) target = $region17
    $region16: #{tpu_custom_call.1} parent=1 // pred_region
      %41 = dma.done [#allocation4], 256
    $region17: #{tpu_custom_call.1} parent=1 // pred_fallthru
      _
    %42 = vsyncpa [#allocation3], 1
    %43 = vsyncpa [#allocation4], 1

</llo_original>
